<compile_context>
chip_gen: v7x
topology: tpu7x:2x2x1
jax: 0.10.0
libtpu: 0.0.40
codegen_flags: <defaults>
</compile_context>

<pallas_src>
import jax
import jax.numpy as jnp
from jax.experimental import pallas as pl
from jax.experimental.pallas import tpu as pltpu


# ----------------------- kernel A: P = Sinkhorn(weight / T) -----------------------
def _logsumexp(s, axis):
    m = jnp.max(s, axis=axis, keepdims=True)
    return m + jnp.log(jnp.sum(jnp.exp(s - m), axis=axis, keepdims=True))


def _make_sinkhorn_matrix_kernel(num_steps: int, temperature: float):
    def kernel(w_ref, p_ref):
        S = w_ref[...].astype(jnp.float32) / jnp.float32(temperature)
        for _ in range(num_steps):          # num_steps is static -> unrolled
            S = S - _logsumexp(S, axis=1)   # row normalisation
            S = S - _logsumexp(S, axis=0)   # column normalisation
        p_ref[...] = jnp.exp(S)             # doubly stochastic matrix
    return kernel


def doubly_stochastic_matrix(weight, num_steps: int, temperature: float):
    num_dim = weight.shape[0]
    return pl.pallas_call(
        _make_sinkhorn_matrix_kernel(num_steps, temperature),
        out_shape=jax.ShapeDtypeStruct((num_dim, num_dim), jnp.float32),
        grid=(1,),
        in_specs=[pl.BlockSpec((num_dim, num_dim), lambda i: (0, 0))],
        out_specs=pl.BlockSpec((num_dim, num_dim), lambda i: (0, 0)),
        cost_estimate=pl.CostEstimate(
            flops=4 * num_steps * num_dim * num_dim,
            transcendentals=(2 * num_steps + 1) * num_dim * num_dim,
            bytes_accessed=2 * 4 * num_dim * num_dim,
        ),
    )(weight)


# ----------------------- kernel B bodies -----------------------
def _mul_left_kernel(p_ref, x_ref, o_ref):
    # o_tile = P_block @ x_tile.  Contraction dim = rows of x_tile (never padded).
    o_ref[...] = jnp.dot(
        p_ref[...], x_ref[...], preferred_element_type=jnp.float32
    ).astype(o_ref.dtype)


def _mul_right_kernel(p_ref, x_ref, o_ref):
    # o_tile = x_tile @ P_block.  Contraction dim = full lane width of x_tile.
    o_ref[...] = jnp.dot(
        x_ref[...], p_ref[...], preferred_element_type=jnp.float32
    ).astype(o_ref.dtype)


# ----------------------- helpers -----------------------
_DEFAULT_TILE_BUDGET = 2 * 1024 * 1024   # ~2 MiB per tile; x+out double-buffered
                                         # ~= 8 MiB, safe on v5e's 16 MiB scoped
                                         # default and on v7x's 64 MiB VMEM.
                                         # (Raise vmem_limit_bytes if you go bigger.)


def _pick_tile(size, align, bytes_per_unit, budget):
    """Byte-budgeted tile length along the streamed (non-contracting) axis.

    Full extent if it fits the budget (always a legal block dim), otherwise the
    largest `align`-multiple whose tile stays under `budget` bytes — MiB-scale
    tiles amortise the ~0.35 us per-grid-step overhead on this HBM-bound stream.
    """
    if size * bytes_per_unit <= budget:
        return int(size)
    tile = (budget // max(int(bytes_per_unit), 1)) // align * align
    return int(max(align, min(size, tile)))


def _largest_divisor_leq(n, cap):
    for g in range(min(int(cap), int(n)), 0, -1):
        if n % g == 0:
            return g
    return 1


def _packed_row_block(batch, num_dim):
    """Rows per grid step for the packed 3-D path, or None to fall back.

    row_block = num_dim * nb with nb | batch and num_dim*nb % 8 == 0 (or the full
    extent), so row blocks cover whole batches and the contraction dim of the
    block-diagonal matmul is always fully valid (no padded-garbage contamination).
    """
    if num_dim > 128:
        return None                      # one batch already fills the MXU rows
    rows = batch * num_dim
    if rows <= 128:
        return rows                      # single full-extent row block
    nb_max = max(1, 128 // num_dim)
    for nb in range(nb_max, 0, -1):
        if batch % nb == 0 and (num_dim * nb) % 8 == 0:
            return num_dim * nb
    return None


def _cast_operator(p, x_dtype):
    # MXU takes bf16 natively: cast the tiny operator once in the wrapper so the
    # streamed tile never needs an in-kernel up-cast (frees VALU slots / vregs).
    if jnp.issubdtype(x_dtype, jnp.floating) and jnp.dtype(x_dtype).itemsize < 4:
        return p.astype(x_dtype)
    return p


def _matmul_cost(num_dim, x):
    x_bytes = x.size * x.dtype.itemsize
    return pl.CostEstimate(
        flops=2 * x.size * num_dim,
        transcendentals=0,
        bytes_accessed=2 * x_bytes + 4 * num_dim * num_dim,
    )


# ----------------------- apply paths -----------------------
def _apply_left_2d(P, x, num_dim, budget):
    # x: (num_dim, M)  -> out = P @ x, streamed over lane tiles of M (lane-dense).
    M = x.shape[1]
    tile = _pick_tile(M, 128, num_dim * x.dtype.itemsize, budget)
    return pl.pallas_call(
        _mul_left_kernel,
        out_shape=jax.ShapeDtypeStruct((num_dim, M), x.dtype),
        grid=(pl.cdiv(M, tile),),
        in_specs=[
            pl.BlockSpec((num_dim, num_dim), lambda j: (0, 0)),
            pl.BlockSpec((num_dim, tile), lambda j: (0, j)),
        ],
        out_specs=pl.BlockSpec((num_dim, tile), lambda j: (0, j)),
        compiler_params=pltpu.CompilerParams(dimension_semantics=("parallel",)),
        cost_estimate=_matmul_cost(num_dim, x),
    )(P, x)


def _apply_right_2d(P, x, num_dim, budget):
    # x: (M, num_dim)  -> out = x @ P, lane-densified.
    # Pack g consecutive rows into one W = g*num_dim (<=128) wide row via a free
    # row-major reshape and right-multiply by the block-diagonal I_g (x) P.
    M = x.shape[0]
    g = _largest_divisor_leq(M, max(1, 128 // num_dim))
    W = g * num_dim
    p_op = P if g == 1 else jnp.kron(jnp.eye(g, dtype=P.dtype), P)
    xp = x.reshape(M // g, W)                 # contiguous -> free view
    rows = M // g
    tile = _pick_tile(rows, 8, W * x.dtype.itemsize, budget)
    out = pl.pallas_call(
        _mul_right_kernel,
        out_shape=jax.ShapeDtypeStruct((rows, W), x.dtype),
        grid=(pl.cdiv(rows, tile),),
        in_specs=[
            pl.BlockSpec((W, W), lambda i: (0, 0)),
            pl.BlockSpec((tile, W), lambda i: (i, 0)),
        ],
        out_specs=pl.BlockSpec((tile, W), lambda i: (i, 0)),
        compiler_params=pltpu.CompilerParams(dimension_semantics=("parallel",)),
        cost_estimate=_matmul_cost(num_dim, x),
    )(p_op, xp)
    return out.reshape(M, num_dim)


def _apply_left_3d(P, x, num_dim, budget):
    # x: (B, num_dim, K) -> out[b] = P @ x[b].
    B, _, K = x.shape
    row_block = _packed_row_block(B, num_dim)
    if row_block is not None:
        # Packed path: view x as (B*num_dim, K) (free reshape) and left-multiply
        # whole-batch row blocks by I_nb (x) P.  Cuts grid steps ~nb-fold and
        # fills the MXU rows even for small K.
        R = B * num_dim
        nb = row_block // num_dim
        p_op = P if nb == 1 else jnp.kron(jnp.eye(nb, dtype=P.dtype), P)
        xr = x.reshape(R, K)                  # contiguous -> free view
        tile_k = _pick_tile(K, 128, row_block * x.dtype.itemsize, budget)
        out = pl.pallas_call(
            _mul_left_kernel,
            out_shape=jax.ShapeDtypeStruct((R, K), x.dtype),
            grid=(R // row_block, pl.cdiv(K, tile_k)),
            in_specs=[
                pl.BlockSpec((row_block, row_block), lambda i, j: (0, 0)),
                pl.BlockSpec((row_block, tile_k), lambda i, j: (i, j)),
            ],
            out_specs=pl.BlockSpec((row_block, tile_k), lambda i, j: (i, j)),
            compiler_params=pltpu.CompilerParams(
                dimension_semantics=("parallel", "parallel")),
            cost_estimate=_matmul_cost(num_dim, x),
        )(p_op, xr)
        return out.reshape(B, num_dim, K)

    # Fallback: per-batch grid with squeezed batch block dim (no packing possible
    # without breaking the whole-batch / 8-sublane block constraints).
    tile_k = _pick_tile(K, 128, num_dim * x.dtype.itemsize, budget)
    return pl.pallas_call(
        _mul_left_kernel,
        out_shape=jax.ShapeDtypeStruct((B, num_dim, K), x.dtype),
        grid=(B, pl.cdiv(K, tile_k)),
        in_specs=[
            pl.BlockSpec((num_dim, num_dim), lambda b, j: (0, 0)),
            pl.BlockSpec((None, num_dim, tile_k), lambda b, j: (b, 0, j)),
        ],
        out_specs=pl.BlockSpec((None, num_dim, tile_k), lambda b, j: (b, 0, j)),
        compiler_params=pltpu.CompilerParams(
            dimension_semantics=("parallel", "parallel")),
        cost_estimate=_matmul_cost(num_dim, x),
    )(P, x)


# ------------------------------ forward dispatch ------------------------------
def sinkhorn_net_forward(x, weight, num_steps: int, temperature: float = 1.0,
                         tile_budget_bytes: int = _DEFAULT_TILE_BUDGET):
    """Mirrors SinkhornNet.forward dispatch."""
    if num_steps < 1:
        raise ValueError(f"num_steps={num_steps!r} should be at least 1")
    num_dim = weight.shape[0]
    shape = tuple(x.shape)
    if num_dim not in shape:
        # Mirrors torch's x.shape.index(num_dim) ValueError.
        raise ValueError(f"num_dim={num_dim} not found in x.shape={shape}")
    dim_idx = shape.index(num_dim)

    P = doubly_stochastic_matrix(weight, num_steps, temperature)
    P = _cast_operator(P, x.dtype)

    if x.ndim == 3:
        if shape[1] != num_dim:
            # torch's `P @ x` would fail here too; don't silently read garbage.
            raise ValueError(
                f"3-D input must have num_dim={num_dim} at axis 1, got {shape}")
        return _apply_left_3d(P, x, num_dim, tile_budget_bytes)   # batched P @ x
    if x.ndim == 2:
        if dim_idx == 0:
            return _apply_left_2d(P, x, num_dim, tile_budget_bytes)   # P @ x
        return _apply_right_2d(P, x, num_dim, tile_budget_bytes)      # x @ P
    raise ValueError(f"SinkhornNet forward supports 2-D/3-D inputs, got ndim={x.ndim}")


# ------------------------- pure-JAX reference -------------------------
def _ref_forward(x, weight, num_steps, temperature):
    S = weight / temperature
    for _ in range(num_steps):
        S = S - jax.scipy.special.logsumexp(S, axis=1, keepdims=True)
        S = S - jax.scipy.special.logsumexp(S, axis=0, keepdims=True)
    P = jnp.exp(S)
    num_dim = weight.shape[0]
    dim_idx = list(x.shape).index(num_dim)
    if dim_idx == 0 or x.ndim == 3:
        return jnp.matmul(P, x)
    elif dim_idx == 1:
        return jnp.matmul(x, P)


if __name__ == "__main__":
    num_dim = 8
    num_steps = 10
    temperature = 1.0

    key = jax.random.PRNGKey(0)
    kw, kx = jax.random.split(key)
    # nn.Parameter(torch.ones(num_dim, num_dim)) only fixes the shape; use a
    # deterministic random init so the Sinkhorn result is non-trivial.
    weight = jax.random.normal(kw, (num_dim, num_dim), dtype=jnp.float32)

    # case 1: x is (batch, num_dim)   -> x @ P   (lane-dense packed right-multiply)
    x1 = jax.random.normal(kx, (16, num_dim), dtype=jnp.float32)
    # case 2: x is (num_dim, batch)   -> P @ x
    x2 = jnp.transpose(x1)
    # case 3: x is (B, num_dim, K)    -> batched P @ x (packed, single row block)
    x3 = jax.random.normal(jax.random.fold_in(kx, 3), (4, num_dim, 16), dtype=jnp.float32)
    # case 4: tall right-multiply; tiny tile budget forces a multi-step grid.
    x4 = jax.random.normal(jax.random.fold_in(kx, 4), (4096, num_dim), dtype=jnp.float32)
    # case 5: many-batch 3-D input -> packed path with several 128-row blocks.
    x5 = jax.random.normal(jax.random.fold_in(kx, 5), (48, num_dim, 16), dtype=jnp.float32)

    y1 = sinkhorn_net_forward(x1, weight, num_steps, temperature)
    y2 = sinkhorn_net_forward(x2, weight, num_steps, temperature)
    y3 = sinkhorn_net_forward(x3, weight, num_steps, temperature)
    y4 = sinkhorn_net_forward(x4, weight, num_steps, temperature,
                              tile_budget_bytes=64 * 1024)
    y5 = sinkhorn_net_forward(x5, weight, num_steps, temperature)
    jax.block_until_ready((y1, y2, y3, y4, y5))

    r1 = _ref_forward(x1, weight, num_steps, temperature)
    r2 = _ref_forward(x2, weight, num_steps, temperature)
    r3 = _ref_forward(x3, weight, num_steps, temperature)
    r4 = _ref_forward(x4, weight, num_steps, temperature)
    r5 = _ref_forward(x5, weight, num_steps, temperature)

    for y, r in ((y1, r1), (y2, r2), (y3, r3), (y4, r4), (y5, r5)):
        assert y.shape == r.shape
        assert jnp.allclose(y, r, atol=1e-5, rtol=1e-5)
    print("KERNEL_OK")
</pallas_src>

<mosaic_0001>
module attributes {stable_mosaic.version = 11 : i64} {
  func.func @kernel(%arg0: i32, %arg1: memref<8x8xf32, #tpu.memory_space<vmem>>, %arg2: memref<8x8xf32, #tpu.memory_space<vmem>>) attributes {dimension_semantics = [#tpu.dimension_semantics<arbitrary>], iteration_bounds = array<i64: 1>, scalar_prefetch = 0 : i64, scratch_operands = 0 : i64, tpu.core_type = #tpu.core_type<tc>, window_params = [{pipeline_mode = #tpu.pipeline_mode<synchronous>, transform_indices = @transform_0, window_bounds = array<i64: 8, 8>}, {pipeline_mode = #tpu.pipeline_mode<synchronous>, transform_indices = @transform_1, window_bounds = array<i64: 8, 8>}]} {
    %c0 = arith.constant 0 : index
    %c0_0 = arith.constant 0 : index
    %0 = vector.load %arg1[%c0, %c0_0] : memref<8x8xf32, #tpu.memory_space<vmem>>, vector<8x8xf32>
    %cst = arith.constant 1.000000e+00 : f32
    %1 = vector.broadcast %cst : f32 to vector<8x8xf32>
    %2 = arith.divf %0, %1 : vector<8x8xf32>
    %cst_1 = arith.constant dense<0xFF800000> : vector<8xf32>
    %3 = vector.multi_reduction <maximumf>, %2, %cst_1 [1] : vector<8x8xf32> to vector<8xf32>
    %4 = vector.shape_cast %3 : vector<8xf32> to vector<8x1xf32>
    %5 = vector.broadcast %4 : vector<8x1xf32> to vector<8x8xf32>
    %6 = arith.subf %2, %5 : vector<8x8xf32>
    %7 = math.exp %6 : vector<8x8xf32>
    %cst_2 = arith.constant dense<0.000000e+00> : vector<8xf32>
    %8 = vector.multi_reduction <add>, %7, %cst_2 [1] : vector<8x8xf32> to vector<8xf32>
    %9 = vector.shape_cast %8 : vector<8xf32> to vector<8x1xf32>
    %10 = math.log %9 : vector<8x1xf32>
    %11 = arith.addf %4, %10 : vector<8x1xf32>
    %12 = vector.broadcast %11 : vector<8x1xf32> to vector<8x8xf32>
    %13 = arith.subf %2, %12 : vector<8x8xf32>
    %cst_3 = arith.constant dense<0xFF800000> : vector<8xf32>
    %14 = vector.multi_reduction <maximumf>, %13, %cst_3 [0] : vector<8x8xf32> to vector<8xf32>
    %15 = vector.shape_cast %14 : vector<8xf32> to vector<1x8xf32>
    %16 = vector.broadcast %15 : vector<1x8xf32> to vector<8x8xf32>
    %17 = arith.subf %13, %16 : vector<8x8xf32>
    %18 = math.exp %17 : vector<8x8xf32>
    %cst_4 = arith.constant dense<0.000000e+00> : vector<8xf32>
    %19 = vector.multi_reduction <add>, %18, %cst_4 [0] : vector<8x8xf32> to vector<8xf32>
    %20 = vector.shape_cast %19 : vector<8xf32> to vector<1x8xf32>
    %21 = math.log %20 : vector<1x8xf32>
    %22 = arith.addf %15, %21 : vector<1x8xf32>
    %23 = vector.broadcast %22 : vector<1x8xf32> to vector<8x8xf32>
    %24 = arith.subf %13, %23 : vector<8x8xf32>
    %cst_5 = arith.constant dense<0xFF800000> : vector<8xf32>
    %25 = vector.multi_reduction <maximumf>, %24, %cst_5 [1] : vector<8x8xf32> to vector<8xf32>
    %26 = vector.shape_cast %25 : vector<8xf32> to vector<8x1xf32>
    %27 = vector.broadcast %26 : vector<8x1xf32> to vector<8x8xf32>
    %28 = arith.subf %24, %27 : vector<8x8xf32>
    %29 = math.exp %28 : vector<8x8xf32>
    %cst_6 = arith.constant dense<0.000000e+00> : vector<8xf32>
    %30 = vector.multi_reduction <add>, %29, %cst_6 [1] : vector<8x8xf32> to vector<8xf32>
    %31 = vector.shape_cast %30 : vector<8xf32> to vector<8x1xf32>
    %32 = math.log %31 : vector<8x1xf32>
    %33 = arith.addf %26, %32 : vector<8x1xf32>
    %34 = vector.broadcast %33 : vector<8x1xf32> to vector<8x8xf32>
    %35 = arith.subf %24, %34 : vector<8x8xf32>
    %cst_7 = arith.constant dense<0xFF800000> : vector<8xf32>
    %36 = vector.multi_reduction <maximumf>, %35, %cst_7 [0] : vector<8x8xf32> to vector<8xf32>
    %37 = vector.shape_cast %36 : vector<8xf32> to vector<1x8xf32>
    %38 = vector.broadcast %37 : vector<1x8xf32> to vector<8x8xf32>
    %39 = arith.subf %35, %38 : vector<8x8xf32>
    %40 = math.exp %39 : vector<8x8xf32>
    %cst_8 = arith.constant dense<0.000000e+00> : vector<8xf32>
    %41 = vector.multi_reduction <add>, %40, %cst_8 [0] : vector<8x8xf32> to vector<8xf32>
    %42 = vector.shape_cast %41 : vector<8xf32> to vector<1x8xf32>
    %43 = math.log %42 : vector<1x8xf32>
    %44 = arith.addf %37, %43 : vector<1x8xf32>
    %45 = vector.broadcast %44 : vector<1x8xf32> to vector<8x8xf32>
    %46 = arith.subf %35, %45 : vector<8x8xf32>
    %cst_9 = arith.constant dense<0xFF800000> : vector<8xf32>
    %47 = vector.multi_reduction <maximumf>, %46, %cst_9 [1] : vector<8x8xf32> to vector<8xf32>
    %48 = vector.shape_cast %47 : vector<8xf32> to vector<8x1xf32>
    %49 = vector.broadcast %48 : vector<8x1xf32> to vector<8x8xf32>
    %50 = arith.subf %46, %49 : vector<8x8xf32>
    %51 = math.exp %50 : vector<8x8xf32>
    %cst_10 = arith.constant dense<0.000000e+00> : vector<8xf32>
    %52 = vector.multi_reduction <add>, %51, %cst_10 [1] : vector<8x8xf32> to vector<8xf32>
    %53 = vector.shape_cast %52 : vector<8xf32> to vector<8x1xf32>
    %54 = math.log %53 : vector<8x1xf32>
    %55 = arith.addf %48, %54 : vector<8x1xf32>
    %56 = vector.broadcast %55 : vector<8x1xf32> to vector<8x8xf32>
    %57 = arith.subf %46, %56 : vector<8x8xf32>
    %cst_11 = arith.constant dense<0xFF800000> : vector<8xf32>
    %58 = vector.multi_reduction <maximumf>, %57, %cst_11 [0] : vector<8x8xf32> to vector<8xf32>
    %59 = vector.shape_cast %58 : vector<8xf32> to vector<1x8xf32>
    %60 = vector.broadcast %59 : vector<1x8xf32> to vector<8x8xf32>
    %61 = arith.subf %57, %60 : vector<8x8xf32>
    %62 = math.exp %61 : vector<8x8xf32>
    %cst_12 = arith.constant dense<0.000000e+00> : vector<8xf32>
    %63 = vector.multi_reduction <add>, %62, %cst_12 [0] : vector<8x8xf32> to vector<8xf32>
    %64 = vector.shape_cast %63 : vector<8xf32> to vector<1x8xf32>
    %65 = math.log %64 : vector<1x8xf32>
    %66 = arith.addf %59, %65 : vector<1x8xf32>
    %67 = vector.broadcast %66 : vector<1x8xf32> to vector<8x8xf32>
    %68 = arith.subf %57, %67 : vector<8x8xf32>
    %cst_13 = arith.constant dense<0xFF800000> : vector<8xf32>
    %69 = vector.multi_reduction <maximumf>, %68, %cst_13 [1] : vector<8x8xf32> to vector<8xf32>
    %70 = vector.shape_cast %69 : vector<8xf32> to vector<8x1xf32>
    %71 = vector.broadcast %70 : vector<8x1xf32> to vector<8x8xf32>
    %72 = arith.subf %68, %71 : vector<8x8xf32>
    %73 = math.exp %72 : vector<8x8xf32>
    %cst_14 = arith.constant dense<0.000000e+00> : vector<8xf32>
    %74 = vector.multi_reduction <add>, %73, %cst_14 [1] : vector<8x8xf32> to vector<8xf32>
    %75 = vector.shape_cast %74 : vector<8xf32> to vector<8x1xf32>
    %76 = math.log %75 : vector<8x1xf32>
    %77 = arith.addf %70, %76 : vector<8x1xf32>
    %78 = vector.broadcast %77 : vector<8x1xf32> to vector<8x8xf32>
    %79 = arith.subf %68, %78 : vector<8x8xf32>
    %cst_15 = arith.constant dense<0xFF800000> : vector<8xf32>
    %80 = vector.multi_reduction <maximumf>, %79, %cst_15 [0] : vector<8x8xf32> to vector<8xf32>
    %81 = vector.shape_cast %80 : vector<8xf32> to vector<1x8xf32>
    %82 = vector.broadcast %81 : vector<1x8xf32> to vector<8x8xf32>
    %83 = arith.subf %79, %82 : vector<8x8xf32>
    %84 = math.exp %83 : vector<8x8xf32>
    %cst_16 = arith.constant dense<0.000000e+00> : vector<8xf32>
    %85 = vector.multi_reduction <add>, %84, %cst_16 [0] : vector<8x8xf32> to vector<8xf32>
    %86 = vector.shape_cast %85 : vector<8xf32> to vector<1x8xf32>
    %87 = math.log %86 : vector<1x8xf32>
    %88 = arith.addf %81, %87 : vector<1x8xf32>
    %89 = vector.broadcast %88 : vector<1x8xf32> to vector<8x8xf32>
    %90 = arith.subf %79, %89 : vector<8x8xf32>
    %cst_17 = arith.constant dense<0xFF800000> : vector<8xf32>
    %91 = vector.multi_reduction <maximumf>, %90, %cst_17 [1] : vector<8x8xf32> to vector<8xf32>
    %92 = vector.shape_cast %91 : vector<8xf32> to vector<8x1xf32>
    %93 = vector.broadcast %92 : vector<8x1xf32> to vector<8x8xf32>
    %94 = arith.subf %90, %93 : vector<8x8xf32>
    %95 = math.exp %94 : vector<8x8xf32>
    %cst_18 = arith.constant dense<0.000000e+00> : vector<8xf32>
    %96 = vector.multi_reduction <add>, %95, %cst_18 [1] : vector<8x8xf32> to vector<8xf32>
    %97 = vector.shape_cast %96 : vector<8xf32> to vector<8x1xf32>
    %98 = math.log %97 : vector<8x1xf32>
    %99 = arith.addf %92, %98 : vector<8x1xf32>
    %100 = vector.broadcast %99 : vector<8x1xf32> to vector<8x8xf32>
    %101 = arith.subf %90, %100 : vector<8x8xf32>
    %cst_19 = arith.constant dense<0xFF800000> : vector<8xf32>
    %102 = vector.multi_reduction <maximumf>, %101, %cst_19 [0] : vector<8x8xf32> to vector<8xf32>
    %103 = vector.shape_cast %102 : vector<8xf32> to vector<1x8xf32>
    %104 = vector.broadcast %103 : vector<1x8xf32> to vector<8x8xf32>
    %105 = arith.subf %101, %104 : vector<8x8xf32>
    %106 = math.exp %105 : vector<8x8xf32>
    %cst_20 = arith.constant dense<0.000000e+00> : vector<8xf32>
    %107 = vector.multi_reduction <add>, %106, %cst_20 [0] : vector<8x8xf32> to vector<8xf32>
    %108 = vector.shape_cast %107 : vector<8xf32> to vector<1x8xf32>
    %109 = math.log %108 : vector<1x8xf32>
    %110 = arith.addf %103, %109 : vector<1x8xf32>
    %111 = vector.broadcast %110 : vector<1x8xf32> to vector<8x8xf32>
    %112 = arith.subf %101, %111 : vector<8x8xf32>
    %cst_21 = arith.constant dense<0xFF800000> : vector<8xf32>
    %113 = vector.multi_reduction <maximumf>, %112, %cst_21 [1] : vector<8x8xf32> to vector<8xf32>
    %114 = vector.shape_cast %113 : vector<8xf32> to vector<8x1xf32>
    %115 = vector.broadcast %114 : vector<8x1xf32> to vector<8x8xf32>
    %116 = arith.subf %112, %115 : vector<8x8xf32>
    %117 = math.exp %116 : vector<8x8xf32>
    %cst_22 = arith.constant dense<0.000000e+00> : vector<8xf32>
    %118 = vector.multi_reduction <add>, %117, %cst_22 [1] : vector<8x8xf32> to vector<8xf32>
    %119 = vector.shape_cast %118 : vector<8xf32> to vector<8x1xf32>
    %120 = math.log %119 : vector<8x1xf32>
    %121 = arith.addf %114, %120 : vector<8x1xf32>
    %122 = vector.broadcast %121 : vector<8x1xf32> to vector<8x8xf32>
    %123 = arith.subf %112, %122 : vector<8x8xf32>
    %cst_23 = arith.constant dense<0xFF800000> : vector<8xf32>
    %124 = vector.multi_reduction <maximumf>, %123, %cst_23 [0] : vector<8x8xf32> to vector<8xf32>
    %125 = vector.shape_cast %124 : vector<8xf32> to vector<1x8xf32>
    %126 = vector.broadcast %125 : vector<1x8xf32> to vector<8x8xf32>
    %127 = arith.subf %123, %126 : vector<8x8xf32>
    %128 = math.exp %127 : vector<8x8xf32>
    %cst_24 = arith.constant dense<0.000000e+00> : vector<8xf32>
    %129 = vector.multi_reduction <add>, %128, %cst_24 [0] : vector<8x8xf32> to vector<8xf32>
    %130 = vector.shape_cast %129 : vector<8xf32> to vector<1x8xf32>
    %131 = math.log %130 : vector<1x8xf32>
    %132 = arith.addf %125, %131 : vector<1x8xf32>
    %133 = vector.broadcast %132 : vector<1x8xf32> to vector<8x8xf32>
    %134 = arith.subf %123, %133 : vector<8x8xf32>
    %cst_25 = arith.constant dense<0xFF800000> : vector<8xf32>
    %135 = vector.multi_reduction <maximumf>, %134, %cst_25 [1] : vector<8x8xf32> to vector<8xf32>
    %136 = vector.shape_cast %135 : vector<8xf32> to vector<8x1xf32>
    %137 = vector.broadcast %136 : vector<8x1xf32> to vector<8x8xf32>
    %138 = arith.subf %134, %137 : vector<8x8xf32>
    %139 = math.exp %138 : vector<8x8xf32>
    %cst_26 = arith.constant dense<0.000000e+00> : vector<8xf32>
    %140 = vector.multi_reduction <add>, %139, %cst_26 [1] : vector<8x8xf32> to vector<8xf32>
    %141 = vector.shape_cast %140 : vector<8xf32> to vector<8x1xf32>
    %142 = math.log %141 : vector<8x1xf32>
    %143 = arith.addf %136, %142 : vector<8x1xf32>
    %144 = vector.broadcast %143 : vector<8x1xf32> to vector<8x8xf32>
    %145 = arith.subf %134, %144 : vector<8x8xf32>
    %cst_27 = arith.constant dense<0xFF800000> : vector<8xf32>
    %146 = vector.multi_reduction <maximumf>, %145, %cst_27 [0] : vector<8x8xf32> to vector<8xf32>
    %147 = vector.shape_cast %146 : vector<8xf32> to vector<1x8xf32>
    %148 = vector.broadcast %147 : vector<1x8xf32> to vector<8x8xf32>
    %149 = arith.subf %145, %148 : vector<8x8xf32>
    %150 = math.exp %149 : vector<8x8xf32>
    %cst_28 = arith.constant dense<0.000000e+00> : vector<8xf32>
    %151 = vector.multi_reduction <add>, %150, %cst_28 [0] : vector<8x8xf32> to vector<8xf32>
    %152 = vector.shape_cast %151 : vector<8xf32> to vector<1x8xf32>
    %153 = math.log %152 : vector<1x8xf32>
    %154 = arith.addf %147, %153 : vector<1x8xf32>
    %155 = vector.broadcast %154 : vector<1x8xf32> to vector<8x8xf32>
    %156 = arith.subf %145, %155 : vector<8x8xf32>
    %cst_29 = arith.constant dense<0xFF800000> : vector<8xf32>
    %157 = vector.multi_reduction <maximumf>, %156, %cst_29 [1] : vector<8x8xf32> to vector<8xf32>
    %158 = vector.shape_cast %157 : vector<8xf32> to vector<8x1xf32>
    %159 = vector.broadcast %158 : vector<8x1xf32> to vector<8x8xf32>
    %160 = arith.subf %156, %159 : vector<8x8xf32>
    %161 = math.exp %160 : vector<8x8xf32>
    %cst_30 = arith.constant dense<0.000000e+00> : vector<8xf32>
    %162 = vector.multi_reduction <add>, %161, %cst_30 [1] : vector<8x8xf32> to vector<8xf32>
    %163 = vector.shape_cast %162 : vector<8xf32> to vector<8x1xf32>
    %164 = math.log %163 : vector<8x1xf32>
    %165 = arith.addf %158, %164 : vector<8x1xf32>
    %166 = vector.broadcast %165 : vector<8x1xf32> to vector<8x8xf32>
    %167 = arith.subf %156, %166 : vector<8x8xf32>
    %cst_31 = arith.constant dense<0xFF800000> : vector<8xf32>
    %168 = vector.multi_reduction <maximumf>, %167, %cst_31 [0] : vector<8x8xf32> to vector<8xf32>
    %169 = vector.shape_cast %168 : vector<8xf32> to vector<1x8xf32>
    %170 = vector.broadcast %169 : vector<1x8xf32> to vector<8x8xf32>
    %171 = arith.subf %167, %170 : vector<8x8xf32>
    %172 = math.exp %171 : vector<8x8xf32>
    %cst_32 = arith.constant dense<0.000000e+00> : vector<8xf32>
    %173 = vector.multi_reduction <add>, %172, %cst_32 [0] : vector<8x8xf32> to vector<8xf32>
    %174 = vector.shape_cast %173 : vector<8xf32> to vector<1x8xf32>
    %175 = math.log %174 : vector<1x8xf32>
    %176 = arith.addf %169, %175 : vector<1x8xf32>
    %177 = vector.broadcast %176 : vector<1x8xf32> to vector<8x8xf32>
    %178 = arith.subf %167, %177 : vector<8x8xf32>
    %cst_33 = arith.constant dense<0xFF800000> : vector<8xf32>
    %179 = vector.multi_reduction <maximumf>, %178, %cst_33 [1] : vector<8x8xf32> to vector<8xf32>
    %180 = vector.shape_cast %179 : vector<8xf32> to vector<8x1xf32>
    %181 = vector.broadcast %180 : vector<8x1xf32> to vector<8x8xf32>
    %182 = arith.subf %178, %181 : vector<8x8xf32>
    %183 = math.exp %182 : vector<8x8xf32>
    %cst_34 = arith.constant dense<0.000000e+00> : vector<8xf32>
    %184 = vector.multi_reduction <add>, %183, %cst_34 [1] : vector<8x8xf32> to vector<8xf32>
    %185 = vector.shape_cast %184 : vector<8xf32> to vector<8x1xf32>
    %186 = math.log %185 : vector<8x1xf32>
    %187 = arith.addf %180, %186 : vector<8x1xf32>
    %188 = vector.broadcast %187 : vector<8x1xf32> to vector<8x8xf32>
    %189 = arith.subf %178, %188 : vector<8x8xf32>
    %cst_35 = arith.constant dense<0xFF800000> : vector<8xf32>
    %190 = vector.multi_reduction <maximumf>, %189, %cst_35 [0] : vector<8x8xf32> to vector<8xf32>
    %191 = vector.shape_cast %190 : vector<8xf32> to vector<1x8xf32>
    %192 = vector.broadcast %191 : vector<1x8xf32> to vector<8x8xf32>
    %193 = arith.subf %189, %192 : vector<8x8xf32>
    %194 = math.exp %193 : vector<8x8xf32>
    %cst_36 = arith.constant dense<0.000000e+00> : vector<8xf32>
    %195 = vector.multi_reduction <add>, %194, %cst_36 [0] : vector<8x8xf32> to vector<8xf32>
    %196 = vector.shape_cast %195 : vector<8xf32> to vector<1x8xf32>
    %197 = math.log %196 : vector<1x8xf32>
    %198 = arith.addf %191, %197 : vector<1x8xf32>
    %199 = vector.broadcast %198 : vector<1x8xf32> to vector<8x8xf32>
    %200 = arith.subf %189, %199 : vector<8x8xf32>
    %cst_37 = arith.constant dense<0xFF800000> : vector<8xf32>
    %201 = vector.multi_reduction <maximumf>, %200, %cst_37 [1] : vector<8x8xf32> to vector<8xf32>
    %202 = vector.shape_cast %201 : vector<8xf32> to vector<8x1xf32>
    %203 = vector.broadcast %202 : vector<8x1xf32> to vector<8x8xf32>
    %204 = arith.subf %200, %203 : vector<8x8xf32>
    %205 = math.exp %204 : vector<8x8xf32>
    %cst_38 = arith.constant dense<0.000000e+00> : vector<8xf32>
    %206 = vector.multi_reduction <add>, %205, %cst_38 [1] : vector<8x8xf32> to vector<8xf32>
    %207 = vector.shape_cast %206 : vector<8xf32> to vector<8x1xf32>
    %208 = math.log %207 : vector<8x1xf32>
    %209 = arith.addf %202, %208 : vector<8x1xf32>
    %210 = vector.broadcast %209 : vector<8x1xf32> to vector<8x8xf32>
    %211 = arith.subf %200, %210 : vector<8x8xf32>
    %cst_39 = arith.constant dense<0xFF800000> : vector<8xf32>
    %212 = vector.multi_reduction <maximumf>, %211, %cst_39 [0] : vector<8x8xf32> to vector<8xf32>
    %213 = vector.shape_cast %212 : vector<8xf32> to vector<1x8xf32>
    %214 = vector.broadcast %213 : vector<1x8xf32> to vector<8x8xf32>
    %215 = arith.subf %211, %214 : vector<8x8xf32>
    %216 = math.exp %215 : vector<8x8xf32>
    %cst_40 = arith.constant dense<0.000000e+00> : vector<8xf32>
    %217 = vector.multi_reduction <add>, %216, %cst_40 [0] : vector<8x8xf32> to vector<8xf32>
    %218 = vector.shape_cast %217 : vector<8xf32> to vector<1x8xf32>
    %219 = math.log %218 : vector<1x8xf32>
    %220 = arith.addf %213, %219 : vector<1x8xf32>
    %221 = vector.broadcast %220 : vector<1x8xf32> to vector<8x8xf32>
    %222 = arith.subf %211, %221 : vector<8x8xf32>
    %223 = math.exp %222 : vector<8x8xf32>
    %c0_41 = arith.constant 0 : index
    %c0_42 = arith.constant 0 : index
    %224 = vector.load %arg2[%c0_41, %c0_42] : memref<8x8xf32, #tpu.memory_space<vmem>>, vector<8x8xf32>
    tpu.vector_store %arg2[%c0_41, %c0_42], %223 {strides = array<i32>} : memref<8x8xf32, #tpu.memory_space<vmem>>, vector<8x8xf32>,
    return
  }
  func.func @transform_0(%arg0: i32) -> (i32, i32) {
    %c0_i32 = arith.constant 0 : i32
    %c0_i32_0 = arith.constant 0 : i32
    %c0_i32_1 = arith.constant 0 : i32
    return %c0_i32, %c0_i32_0 : i32, i32
  }
  func.func @transform_1(%arg0: i32) -> (i32, i32) {
    %c0_i32 = arith.constant 0 : i32
    %c0_i32_0 = arith.constant 0 : i32
    %c0_i32_1 = arith.constant 0 : i32
    return %c0_i32, %c0_i32_0 : i32, i32
  }
}

</mosaic_0001>

<llo_original>
// kernel: tpu_custom_call.1
$region0: #{tpu_custom_call.1}
  #allocation0 [shape = 'u32[]', space=smem, size = 0x4, offset = 0x4, fixed_abs, tag = 'smem constant byte address 0x4 - core index']
  #allocation1 [shape = 'u32[144,128]{1,0:T(1,128)}', space=vmem, size = 0x12000, scoped, tag = 'internal scratch']
  %s0 = inlined_call_operand.hbm [shape: f32[8,8], index: 0, kind: input, shape index: {}]
  %s1 = inlined_call_operand.hbm [shape: f32[8,8], index: 1, kind: output, shape index: {}]
  %s2 = sld [smem:[#allocation0]]
  $region18: #{tpu_custom_call.1} parent=0
    _
  %s4 = ssub.s32 1, %s2
  %s5 = scalar_select 0, %s4, %s2
  $region1: #{tpu_custom_call.1} parent=0
    #allocation2 [shape = 'u8[4096]{0}', space=vmem, size = 0x1000, scoped, tag = 'input window, operand 0, single buffered']
    #allocation3 [shape = 's32[1]{0}', space=sflag, size = 0x4, scoped, tag = 'scoped memory for tpu_custom_call.1']
    #allocation4 [shape = 's32[1]{0}', space=sflag, size = 0x4, scoped, tag = 'scoped memory for tpu_custom_call.1']
    #allocation5 [shape = 'u8[4096]{0}', space=vmem, size = 0x1000, scoped, tag = 'output window, operand 0, single buffered']
    %6 = vsyncpa [#allocation3], 0
    %7 = vsyncpa [#allocation4], 0
    // Predicated region
    $region2: #{tpu_custom_call.1} parent=1 // pred_check
      _
    $region3: #{tpu_custom_call.1} parent=1 // pred_check_branch
      %9 = sbr.rel (0) target = $region5
    $region4: #{tpu_custom_call.1} parent=1 // pred_region
      %s11 = ssub.s32 128, 128
      %12 = vsyncadd [#allocation3], %s11
      %s14 = sshll.u32 [#allocation2], 4
      %s15 = int_to_ptr.vmem [resolvable:$true] %s14
      %17 = dma.hbm_to_vmem [thread:$0]  %s0, 128, %s15, [#allocation3]
    $region5: #{tpu_custom_call.1} parent=1 // pred_fallthru
      _
    // Predicated region
    $region6: #{tpu_custom_call.1} parent=1 // pred_check
      _
    $region7: #{tpu_custom_call.1} parent=1 // pred_check_branch
      %19 = sbr.rel (0) target = $region9
    $region8: #{tpu_custom_call.1} parent=1 // pred_region
      %20 = dma.done [#allocation3], 128
    $region9: #{tpu_custom_call.1} parent=1 // pred_fallthru
      _
    %v21 = vld [vmem:[#allocation2] sm:$0xff]
    %vm22 = vcmask 64512
    %v23 = vsel %vm22, %v21, -inf
    %24 = vmax.xlane.f32.xlu0 %v23
    %v25 = vpop.xlane.xlu0 %24
    %v26 = vsub.f32 %v21, %v25
    %v27 = vmul.f32 %v26, 1.442695
    %v28 = vpow.pop %v27
    %v29 = vsel %vm22, %v28, 0.0
    %30 = vadd.xlane.f32.xlu0 %v29
    %v31 = vpop.xlane.xlu0 %30
    %v32 = vlog2.pop %v31
    %v33 = vmul.f32 %v32, 0.6931472
    %v34 = vadd.f32 %v25, %v33
    %v35 = vsub.f32 %v21, %v34
    %v36 = vsel %vm22, %v35, -inf
    %v37 = vrot.slane %v36, 4
    %v38 = vmax.f32 %v36, %v37
    %v39 = vrot.slane %v38, 2
    %v40 = vmax.f32 %v38, %v39
    %v41 = vrot.slane %v40, 1
    %v42 = vmax.f32 %v40, %v41
    %v43 = vsub.f32 %v35, %v42
    %v44 = vmul.f32 %v43, 1.442695
    %v45 = vpow.pop %v44
    %v46 = vsel %vm22, %v45, 0.0
    %v47 = vrot.slane %v46, 4
    %v48 = vadd.f32 %v46, %v47
    %v49 = vrot.slane %v48, 2
    %v50 = vadd.f32 %v48, %v49
    %v51 = vrot.slane %v50, 1
    %v52 = vadd.f32 %v50, %v51
    %v53 = vlog2.pop %v52
    %v54 = vmul.f32 %v53, 0.6931472
    %v55 = vadd.f32 %v42, %v54
    %v56 = vsub.f32 %v35, %v55
    %v57 = vsel %vm22, %v56, -inf
    %58 = vmax.xlane.f32.xlu0 %v57
    %v59 = vpop.xlane.xlu0 %58
    %v60 = vsub.f32 %v56, %v59
    %v61 = vmul.f32 %v60, 1.442695
    %v62 = vpow.pop %v61
    %v63 = vsel %vm22, %v62, 0.0
    %64 = vadd.xlane.f32.xlu0 %v63
    %v65 = vpop.xlane.xlu0 %64
    %v66 = vlog2.pop %v65
    %v67 = vmul.f32 %v66, 0.6931472
    %v68 = vadd.f32 %v59, %v67
    %v69 = vsub.f32 %v56, %v68
    %v70 = vsel %vm22, %v69, -inf
    %v71 = vrot.slane %v70, 4
    %v72 = vmax.f32 %v70, %v71
    %v73 = vrot.slane %v72, 2
    %v74 = vmax.f32 %v72, %v73
    %v75 = vrot.slane %v74, 1
    %v76 = vmax.f32 %v74, %v75
    %v77 = vsub.f32 %v69, %v76
    %v78 = vmul.f32 %v77, 1.442695
    %v79 = vpow.pop %v78
    %v80 = vsel %vm22, %v79, 0.0
    %v81 = vrot.slane %v80, 4
    %v82 = vadd.f32 %v80, %v81
    %v83 = vrot.slane %v82, 2
    %v84 = vadd.f32 %v82, %v83
    %v85 = vrot.slane %v84, 1
    %v86 = vadd.f32 %v84, %v85
    %v87 = vlog2.pop %v86
    %v88 = vmul.f32 %v87, 0.6931472
    %v89 = vadd.f32 %v76, %v88
    %v90 = vsub.f32 %v69, %v89
    %v91 = vsel %vm22, %v90, -inf
    %92 = vmax.xlane.f32.xlu0 %v91
    %v93 = vpop.xlane.xlu0 %92
    %v94 = vsub.f32 %v90, %v93
    %v95 = vmul.f32 %v94, 1.442695
    %v96 = vpow.pop %v95
    %v97 = vsel %vm22, %v96, 0.0
    %98 = vadd.xlane.f32.xlu0 %v97
    %v99 = vpop.xlane.xlu0 %98
    %v100 = vlog2.pop %v99
    %v101 = vmul.f32 %v100, 0.6931472
    %v102 = vadd.f32 %v93, %v101
    %v103 = vsub.f32 %v90, %v102
    %v104 = vsel %vm22, %v103, -inf
    %v105 = vrot.slane %v104, 4
    %v106 = vmax.f32 %v104, %v105
    %v107 = vrot.slane %v106, 2
    %v108 = vmax.f32 %v106, %v107
    %v109 = vrot.slane %v108, 1
    %v110 = vmax.f32 %v108, %v109
    %v111 = vsub.f32 %v103, %v110
    %v112 = vmul.f32 %v111, 1.442695
    %v113 = vpow.pop %v112
    %v114 = vsel %vm22, %v113, 0.0
    %v115 = vrot.slane %v114, 4
    %v116 = vadd.f32 %v114, %v115
    %v117 = vrot.slane %v116, 2
    %v118 = vadd.f32 %v116, %v117
    %v119 = vrot.slane %v118, 1
    %v120 = vadd.f32 %v118, %v119
    %v121 = vlog2.pop %v120
    %v122 = vmul.f32 %v121, 0.6931472
    %v123 = vadd.f32 %v110, %v122
    %v124 = vsub.f32 %v103, %v123
    %v125 = vsel %vm22, %v124, -inf
    %126 = vmax.xlane.f32.xlu0 %v125
    %v127 = vpop.xlane.xlu0 %126
    %v128 = vsub.f32 %v124, %v127
    %v129 = vmul.f32 %v128, 1.442695
    %v130 = vpow.pop %v129
    %v131 = vsel %vm22, %v130, 0.0
    %132 = vadd.xlane.f32.xlu0 %v131
    %v133 = vpop.xlane.xlu0 %132
    %v134 = vlog2.pop %v133
    %v135 = vmul.f32 %v134, 0.6931472
    %v136 = vadd.f32 %v127, %v135
    %v137 = vsub.f32 %v124, %v136
    %v138 = vsel %vm22, %v137, -inf
    %v139 = vrot.slane %v138, 4
    %v140 = vmax.f32 %v138, %v139
    %v141 = vrot.slane %v140, 2
    %v142 = vmax.f32 %v140, %v141
    %v143 = vrot.slane %v142, 1
    %v144 = vmax.f32 %v142, %v143
    %v145 = vsub.f32 %v137, %v144
    %v146 = vmul.f32 %v145, 1.442695
    %v147 = vpow.pop %v146
    %v148 = vsel %vm22, %v147, 0.0
    %v149 = vrot.slane %v148, 4
    %v150 = vadd.f32 %v148, %v149
    %v151 = vrot.slane %v150, 2
    %v152 = vadd.f32 %v150, %v151
    %v153 = vrot.slane %v152, 1
    %v154 = vadd.f32 %v152, %v153
    %v155 = vlog2.pop %v154
    %v156 = vmul.f32 %v155, 0.6931472
    %v157 = vadd.f32 %v144, %v156
    %v158 = vsub.f32 %v137, %v157
    %v159 = vsel %vm22, %v158, -inf
    %160 = vmax.xlane.f32.xlu0 %v159
    %v161 = vpop.xlane.xlu0 %160
    %v162 = vsub.f32 %v158, %v161
    %v163 = vmul.f32 %v162, 1.442695
    %v164 = vpow.pop %v163
    %v165 = vsel %vm22, %v164, 0.0
    %166 = vadd.xlane.f32.xlu0 %v165
    %v167 = vpop.xlane.xlu0 %166
    %v168 = vlog2.pop %v167
    %v169 = vmul.f32 %v168, 0.6931472
    %v170 = vadd.f32 %v161, %v169
    %v171 = vsub.f32 %v158, %v170
    %v172 = vsel %vm22, %v171, -inf
    %v173 = vrot.slane %v172, 4
    %v174 = vmax.f32 %v172, %v173
    %v175 = vrot.slane %v174, 2
    %v176 = vmax.f32 %v174, %v175
    %v177 = vrot.slane %v176, 1
    %v178 = vmax.f32 %v176, %v177
    %v179 = vsub.f32 %v171, %v178
    %v180 = vmul.f32 %v179, 1.442695
    %v181 = vpow.pop %v180
    %v182 = vsel %vm22, %v181, 0.0
    %v183 = vrot.slane %v182, 4
    %v184 = vadd.f32 %v182, %v183
    %v185 = vrot.slane %v184, 2
    %v186 = vadd.f32 %v184, %v185
    %v187 = vrot.slane %v186, 1
    %v188 = vadd.f32 %v186, %v187
    %v189 = vlog2.pop %v188
    %v190 = vmul.f32 %v189, 0.6931472
    %v191 = vadd.f32 %v178, %v190
    %v192 = vsub.f32 %v171, %v191
    %v193 = vsel %vm22, %v192, -inf
    %194 = vmax.xlane.f32.xlu0 %v193
    %v195 = vpop.xlane.xlu0 %194
    %v196 = vsub.f32 %v192, %v195
    %v197 = vmul.f32 %v196, 1.442695
    %v198 = vpow.pop %v197
    %v199 = vsel %vm22, %v198, 0.0
    %200 = vadd.xlane.f32.xlu0 %v199
    %v201 = vpop.xlane.xlu0 %200
    %v202 = vlog2.pop %v201
    %v203 = vmul.f32 %v202, 0.6931472
    %v204 = vadd.f32 %v195, %v203
    %v205 = vsub.f32 %v192, %v204
    %v206 = vsel %vm22, %v205, -inf
    %v207 = vrot.slane %v206, 4
    %v208 = vmax.f32 %v206, %v207
    %v209 = vrot.slane %v208, 2
    %v210 = vmax.f32 %v208, %v209
    %v211 = vrot.slane %v210, 1
    %v212 = vmax.f32 %v210, %v211
    %v213 = vsub.f32 %v205, %v212
    %v214 = vmul.f32 %v213, 1.442695
    %v215 = vpow.pop %v214
    %v216 = vsel %vm22, %v215, 0.0
    %v217 = vrot.slane %v216, 4
    %v218 = vadd.f32 %v216, %v217
    %v219 = vrot.slane %v218, 2
    %v220 = vadd.f32 %v218, %v219
    %v221 = vrot.slane %v220, 1
    %v222 = vadd.f32 %v220, %v221
    %v223 = vlog2.pop %v222
    %v224 = vmul.f32 %v223, 0.6931472
    %v225 = vadd.f32 %v212, %v224
    %v226 = vsub.f32 %v205, %v225
    %v227 = vsel %vm22, %v226, -inf
    %228 = vmax.xlane.f32.xlu0 %v227
    %v229 = vpop.xlane.xlu0 %228
    %v230 = vsub.f32 %v226, %v229
    %v231 = vmul.f32 %v230, 1.442695
    %v232 = vpow.pop %v231
    %v233 = vsel %vm22, %v232, 0.0
    %234 = vadd.xlane.f32.xlu0 %v233
    %v235 = vpop.xlane.xlu0 %234
    %v236 = vlog2.pop %v235
    %v237 = vmul.f32 %v236, 0.6931472
    %v238 = vadd.f32 %v229, %v237
    %v239 = vsub.f32 %v226, %v238
    %v240 = vsel %vm22, %v239, -inf
    %v241 = vrot.slane %v240, 4
    %v242 = vmax.f32 %v240, %v241
    %v243 = vrot.slane %v242, 2
    %v244 = vmax.f32 %v242, %v243
    %v245 = vrot.slane %v244, 1
    %v246 = vmax.f32 %v244, %v245
    %v247 = vsub.f32 %v239, %v246
    %v248 = vmul.f32 %v247, 1.442695
    %v249 = vpow.pop %v248
    %v250 = vsel %vm22, %v249, 0.0
    %v251 = vrot.slane %v250, 4
    %v252 = vadd.f32 %v250, %v251
    %v253 = vrot.slane %v252, 2
    %v254 = vadd.f32 %v252, %v253
    %v255 = vrot.slane %v254, 1
    %v256 = vadd.f32 %v254, %v255
    %v257 = vlog2.pop %v256
    %v258 = vmul.f32 %v257, 0.6931472
    %v259 = vadd.f32 %v246, %v258
    %v260 = vsub.f32 %v239, %v259
    %v261 = vsel %vm22, %v260, -inf
    %262 = vmax.xlane.f32.xlu0 %v261
    %v263 = vpop.xlane.xlu0 %262
    %v264 = vsub.f32 %v260, %v263
    %v265 = vmul.f32 %v264, 1.442695
    %v266 = vpow.pop %v265
    %v267 = vsel %vm22, %v266, 0.0
    %268 = vadd.xlane.f32.xlu0 %v267
    %v269 = vpop.xlane.xlu0 %268
    %v270 = vlog2.pop %v269
    %v271 = vmul.f32 %v270, 0.6931472
    %v272 = vadd.f32 %v263, %v271
    %v273 = vsub.f32 %v260, %v272
    %v274 = vsel %vm22, %v273, -inf
    %v275 = vrot.slane %v274, 4
    %v276 = vmax.f32 %v274, %v275
    %v277 = vrot.slane %v276, 2
    %v278 = vmax.f32 %v276, %v277
    %v279 = vrot.slane %v278, 1
    %v280 = vmax.f32 %v278, %v279
    %v281 = vsub.f32 %v273, %v280
    %v282 = vmul.f32 %v281, 1.442695
    %v283 = vpow.pop %v282
    %v284 = vsel %vm22, %v283, 0.0
    %v285 = vrot.slane %v284, 4
    %v286 = vadd.f32 %v284, %v285
    %v287 = vrot.slane %v286, 2
    %v288 = vadd.f32 %v286, %v287
    %v289 = vrot.slane %v288, 1
    %v290 = vadd.f32 %v288, %v289
    %v291 = vlog2.pop %v290
    %v292 = vmul.f32 %v291, 0.6931472
    %v293 = vadd.f32 %v280, %v292
    %v294 = vsub.f32 %v273, %v293
    %v295 = vsel %vm22, %v294, -inf
    %296 = vmax.xlane.f32.xlu0 %v295
    %v297 = vpop.xlane.xlu0 %296
    %v298 = vsub.f32 %v294, %v297
    %v299 = vmul.f32 %v298, 1.442695
    %v300 = vpow.pop %v299
    %v301 = vsel %vm22, %v300, 0.0
    %302 = vadd.xlane.f32.xlu0 %v301
    %v303 = vpop.xlane.xlu0 %302
    %v304 = vlog2.pop %v303
    %v305 = vmul.f32 %v304, 0.6931472
    %v306 = vadd.f32 %v297, %v305
    %v307 = vsub.f32 %v294, %v306
    %v308 = vsel %vm22, %v307, -inf
    %v309 = vrot.slane %v308, 4
    %v310 = vmax.f32 %v308, %v309
    %v311 = vrot.slane %v310, 2
    %v312 = vmax.f32 %v310, %v311
    %v313 = vrot.slane %v312, 1
    %v314 = vmax.f32 %v312, %v313
    %v315 = vsub.f32 %v307, %v314
    %v316 = vmul.f32 %v315, 1.442695
    %v317 = vpow.pop %v316
    %v318 = vsel %vm22, %v317, 0.0
    %v319 = vrot.slane %v318, 4
    %v320 = vadd.f32 %v318, %v319
    %v321 = vrot.slane %v320, 2
    %v322 = vadd.f32 %v320, %v321
    %v323 = vrot.slane %v322, 1
    %v324 = vadd.f32 %v322, %v323
    %v325 = vlog2.pop %v324
    %v326 = vmul.f32 %v325, 0.6931472
    %v327 = vadd.f32 %v314, %v326
    %v328 = vsub.f32 %v307, %v327
    %v329 = vsel %vm22, %v328, -inf
    %330 = vmax.xlane.f32.xlu0 %v329
    %v331 = vpop.xlane.xlu0 %330
    %v332 = vsub.f32 %v328, %v331
    %v333 = vmul.f32 %v332, 1.442695
    %v334 = vpow.pop %v333
    %v335 = vsel %vm22, %v334, 0.0
    %336 = vadd.xlane.f32.xlu0 %v335
    %v337 = vpop.xlane.xlu0 %336
    %v338 = vlog2.pop %v337
    %v339 = vmul.f32 %v338, 0.6931472
    %v340 = vadd.f32 %v331, %v339
    %v341 = vsub.f32 %v328, %v340
    %v342 = vsel %vm22, %v341, -inf
    %v343 = vrot.slane %v342, 4
    %v344 = vmax.f32 %v342, %v343
    %v345 = vrot.slane %v344, 2
    %v346 = vmax.f32 %v344, %v345
    %v347 = vrot.slane %v346, 1
    %v348 = vmax.f32 %v346, %v347
    %v349 = vsub.f32 %v341, %v348
    %v350 = vmul.f32 %v349, 1.442695
    %v351 = vpow.pop %v350
    %v352 = vsel %vm22, %v351, 0.0
    %v353 = vrot.slane %v352, 4
    %v354 = vadd.f32 %v352, %v353
    %v355 = vrot.slane %v354, 2
    %v356 = vadd.f32 %v354, %v355
    %v357 = vrot.slane %v356, 1
    %v358 = vadd.f32 %v356, %v357
    %v359 = vlog2.pop %v358
    %v360 = vmul.f32 %v359, 0.6931472
    %v361 = vadd.f32 %v348, %v360
    %v362 = vsub.f32 %v341, %v361
    %v363 = vmul.f32 %v362, 1.442695
    %v364 = vpow.pop %v363
    %365 = vst.msk [vmem:[#allocation5] sm:$0xff] %vm22, %v364
    // Predicated region
    $region10: #{tpu_custom_call.1} parent=1 // pred_check
      _
    $region11: #{tpu_custom_call.1} parent=1 // pred_check_branch
      %367 = sbr.rel (0) target = $region13
    $region12: #{tpu_custom_call.1} parent=1 // pred_region
      %s369 = ssub.s32 128, 128
      %370 = vsyncadd [#allocation4], %s369
      %s372 = sshll.u32 [#allocation5], 4
      %s373 = int_to_ptr.vmem [resolvable:$true] %s372
      %375 = dma.vmem_to_hbm [thread:$0]  %s373, 128, %s1, [#allocation4]
    $region13: #{tpu_custom_call.1} parent=1 // pred_fallthru
      _
    // Predicated region
    $region14: #{tpu_custom_call.1} parent=1 // pred_check
      _
    $region15: #{tpu_custom_call.1} parent=1 // pred_check_branch
      %377 = sbr.rel (0) target = $region17
    $region16: #{tpu_custom_call.1} parent=1 // pred_region
      %378 = dma.done [#allocation4], 128
    $region17: #{tpu_custom_call.1} parent=1 // pred_fallthru
      _
    %379 = vsyncpa [#allocation3], 1
    %380 = vsyncpa [#allocation4], 1

</llo_original>
